<compile_context>
chip_gen: v5e
topology: v5e:2x2
jax: 0.10.0
libtpu: 0.0.40
codegen_flags: <defaults>
</compile_context>

<pallas_src>
import math
from functools import partial

import jax
import jax.numpy as jnp
from jax import lax
from jax.experimental import pallas as pl
from jax.experimental.pallas import tpu as pltpu


def _mask_kernel(kpm_ref, mask_ref, *, bl, radius):
    """One grid step = one batch sample x NQ query-blocks.

    kpm_ref : (1, NQ, 1, 3*bl) int8   — windowed key-padding mask
    mask_ref: (1, NQ, bl, 3*bl) int8  — local-attention + key-padding mask
    """
    nq = mask_ref.shape[1]

    # Position geometry is shared by every q-block: compute once per grid step.
    i = lax.broadcasted_iota(jnp.int32, (bl, 3 * bl), 1)
    j = lax.broadcasted_iota(jnp.int32, (bl, 3 * bl), 0)
    rp = (i - bl) - j                              # relative positions
    pos_mask = jnp.abs(rp) > radius                # (bl, 3*bl) bool

    def body(q, carry):
        kp = kpm_ref[0, q] != 0                    # (1, 3*bl) bool key padding
        m = jnp.logical_or(pos_mask, kp)           # (bl, 3*bl)
        # `mask & ~mask.all(dim=-1, keepdims=True)` — un-mask fully-masked rows
        row_all = jnp.min(m.astype(jnp.int32), axis=-1, keepdims=True)
        m = jnp.logical_and(m, row_all == 0)
        mask_ref[0, q] = m.astype(jnp.int8)
        return carry

    lax.fori_loop(0, nq, body, 0)


class FastRelPosIdsPallas:
    def __init__(self, num_heads, rel_pos_max_distance, embed_dim,
                 local_attention_radius, key=None):
        assert local_attention_radius >= rel_pos_max_distance
        self.num_heads = num_heads
        self.rel_pos_max_distance = rel_pos_max_distance
        self.local_attention_radius = local_attention_radius
        self.num_pos_ids = 2 * rel_pos_max_distance + 1
        self.embed_dim = embed_dim
        self.head_dim = embed_dim // num_heads
        key = jax.random.PRNGKey(0) if key is None else key
        # deterministic nn.Embedding(num_pos_ids, embed_dim)-shaped weights
        self.weight = jax.random.normal(
            key, (self.num_pos_ids, embed_dim), dtype=jnp.float32)
        # registered buffer: arange(num_pos_ids) — the embedding lookup with it
        # is the identity, so no gather kernel is needed.
        self.rel_pos_ids_buf = jnp.arange(self.num_pos_ids, dtype=jnp.int32)

    def __call__(self, batch_size, seq_len_q, seq_len_k,
                 segment_ids=None, key_padding_mask=None):
        # segment_ids is unused by the reference forward as well.
        assert seq_len_q == seq_len_k
        seq_len = seq_len_q
        radius = self.local_attention_radius
        max_dist = self.rel_pos_max_distance
        bl = radius + 1
        nbq = math.ceil(seq_len / bl)
        B, H = batch_size, self.num_heads
        R, E, hd = self.num_pos_ids, self.embed_dim, self.head_dim

        # ---- relative position ids: identical for every (b, q) block -> pure JAX
        i = jnp.arange(3 * bl, dtype=jnp.int32)
        j = jnp.arange(bl, dtype=jnp.int32)
        rp = (i[None, :] - bl) - j[:, None]                       # (bl, 3*bl)
        ids_2d = jnp.clip(rp, -max_dist, max_dist) + max_dist
        # TODO(synk): reference returns int64 (LongTensor); TPU Pallas uses int32.
        rel_pos_ids = jnp.broadcast_to(
            ids_2d[None, None], (B * H, nbq, bl, 3 * bl))         # lazy broadcast

        # ---- rel_embeds: rel_embeds(arange(R)) == weight, so just reshape glue
        rel_embeds = jnp.broadcast_to(self.weight[None], (B, R, E))
        rel_embeds = rel_embeds.reshape(B, R, hd, H)
        rel_embeds = jnp.transpose(rel_embeds, (0, 3, 1, 2)).reshape(B * H, R, hd)

        if key_padding_mask is None:
            # Reference branch: mask is just the local-attention window mask.
            mask = jnp.broadcast_to(
                (jnp.abs(rp) > radius)[None, None], (B, nbq, bl, 3 * bl))
            return rel_pos_ids, rel_embeds, mask

        # ---- glue: pad + sliding-window extraction of the key padding mask
        # Kept in XLA (int8, ~3*bl per q-block => tiny vs. the mask output);
        # in-kernel lane-dim dynamic slicing is not worth the lowering risk.
        pad_left = bl
        pad_right = bl + (nbq * bl - seq_len)
        kpm_pad = jnp.pad(key_padding_mask, ((0, 0), (pad_left, pad_right)),
                          constant_values=True)
        sliding = jnp.arange(3 * bl)[None, :] + (jnp.arange(nbq) * bl)[:, None]
        kpm_win = kpm_pad[:, sliding].astype(jnp.int8)[:, :, None, :]  # (B,nbq,1,3bl)

        # ---- choose a big q-chunk NQ that still fits VMEM (double-buffered)
        lane = -(-(3 * bl) // 128) * 128          # padded lane width
        out_q = (-(-bl // 8) * 8) * lane          # int8 bytes / q-block (mask out)
        in_q = 8 * lane                           # int8 bytes / q-block (kpm in)
        budget = 4 * 1024 * 1024                  # per-buffer; x2 buffers ~8 MiB total
        NQ = int(max(1, min(nbq, budget // (out_q + in_q))))
        n_chunks = math.ceil(nbq / NQ)

        kern = partial(_mask_kernel, bl=bl, radius=radius)
        mask_i8 = pl.pallas_call(
            kern,
            out_shape=jax.ShapeDtypeStruct((B, nbq, bl, 3 * bl), jnp.int8),
            grid_spec=pltpu.PrefetchScalarGridSpec(
                num_scalar_prefetch=0,
                grid=(B, n_chunks),
                in_specs=[pl.BlockSpec((1, NQ, 1, 3 * bl),
                                       lambda b, c: (b, c, 0, 0))],
                out_specs=pl.BlockSpec((1, NQ, bl, 3 * bl),
                                       lambda b, c: (b, c, 0, 0)),
            ),
            compiler_params=pltpu.CompilerParams(
                dimension_semantics=("parallel", "parallel")),
        )(kpm_win)

        mask = mask_i8.astype(bool)
        return rel_pos_ids, rel_embeds, mask


if __name__ == "__main__":
    # small deterministic example
    B, seq_len = 2, 8
    num_heads, embed_dim = 4, 32
    max_dist, radius = 2, 3

    key = jax.random.PRNGKey(0)
    module = FastRelPosIdsPallas(num_heads, max_dist, embed_dim, radius, key=key)

    lengths = jnp.array([8, 5])
    key_padding_mask = jnp.arange(seq_len)[None, :] >= lengths[:, None]  # (B, Sk)

    rel_pos_ids, rel_embeds, mask = module(
        B, seq_len, seq_len, key_padding_mask=key_padding_mask)
    jax.block_until_ready((rel_pos_ids, rel_embeds, mask))

    # ---- pure-JAX reference mirroring the PyTorch forward
    bl = radius + 1
    nbq = math.ceil(seq_len / bl)
    R = 2 * max_dist + 1
    hd = embed_dim // num_heads
    i = jnp.arange(3 * bl)
    j = jnp.arange(bl)
    rp = (i[None, :] - bl) - j[:, None]
    ref_ids = jnp.broadcast_to(
        (jnp.clip(rp, -max_dist, max_dist) + max_dist)[None, None],
        (B * num_heads, nbq, bl, 3 * bl)).astype(jnp.int32)
    ref_pos_mask = jnp.broadcast_to(
        (jnp.abs(rp) > radius)[None, None], (B, nbq, bl, 3 * bl))
    kpm_pad = jnp.pad(key_padding_mask,
                      ((0, 0), (bl, bl + nbq * bl - seq_len)),
                      constant_values=True)
    sliding = jnp.arange(3 * bl)[None, :] + (jnp.arange(nbq) * bl)[:, None]
    ref_mask = ref_pos_mask | kpm_pad[:, sliding][:, :, None, :]
    ref_mask = ref_mask & ~jnp.all(ref_mask, axis=3, keepdims=True)
    ref_emb = jnp.tile(module.weight[None], (B, 1, 1)).reshape(
        B, R, hd, num_heads).transpose(0, 3, 1, 2).reshape(B * num_heads, R, hd)

    assert rel_pos_ids.shape == (B * num_heads, nbq, bl, 3 * bl)
    assert rel_embeds.shape == (B * num_heads, R, hd)
    assert mask.shape == (B, nbq, bl, 3 * bl) and mask.dtype == jnp.bool_
    assert jnp.array_equal(rel_pos_ids, ref_ids)
    assert jnp.array_equal(mask, ref_mask)
    assert jnp.allclose(rel_embeds, ref_emb)

    # also check the key_padding_mask=None fast path
    ids_n, emb_n, mask_n = module(B, seq_len, seq_len)
    jax.block_until_ready((ids_n, emb_n, mask_n))
    assert jnp.array_equal(ids_n, ref_ids)
    assert jnp.array_equal(mask_n, ref_pos_mask)
    assert jnp.allclose(emb_n, ref_emb)

    print("KERNEL_OK")
</pallas_src>

<mosaic_0001>
module attributes {stable_mosaic.version = 11 : i64} {
  func.func @_mask_kernel(%arg0: i32, %arg1: i32, %arg2: memref<1x2x1x12xi8, #tpu.memory_space<vmem>>, %arg3: memref<1x2x4x12xi8, #tpu.memory_space<vmem>>) attributes {dimension_semantics = [#tpu.dimension_semantics<parallel>, #tpu.dimension_semantics<parallel>], iteration_bounds = array<i64: 2, 1>, scalar_prefetch = 0 : i64, scratch_operands = 0 : i64, tpu.core_type = #tpu.core_type<tc>, window_params = [{transform_indices = @transform_0, window_bounds = array<i64: 1, 2, 1, 12>}, {transform_indices = @transform_1, window_bounds = array<i64: 1, 2, 4, 12>}]} {
    %0 = tpu.iota {dimensions = array<i32: 1>} : vector<4x12xi32>
    %1 = tpu.iota {dimensions = array<i32: 0>} : vector<4x12xi32>
    %c4_i32 = arith.constant 4 : i32
    %2 = vector.broadcast %c4_i32 : i32 to vector<4x12xi32>
    %3 = arith.subi %0, %2 : vector<4x12xi32>
    %4 = arith.subi %3, %1 : vector<4x12xi32>
    %5 = math.absi %4 : vector<4x12xi32>
    %c3_i32 = arith.constant 3 : i32
    %6 = vector.broadcast %c3_i32 : i32 to vector<4x12xi32>
    %7 = arith.cmpi sgt, %5, %6 : vector<4x12xi32>
    %c0_i32 = arith.constant 0 : i32
    %c2_i32 = arith.constant 2 : i32
    %8 = arith.addi %c0_i32, %c2_i32 : i32
    %c1_i32 = arith.constant 1 : i32
    scf.for %arg4 = %c0_i32 to %8 step %c1_i32  : i32 {
      %c0 = arith.constant 0 : index
      %9 = arith.index_cast %arg4 : i32 to index
      %c0_1 = arith.constant 0 : index
      %c0_2 = arith.constant 0 : index
      %10 = vector.load %arg2[%c0, %9, %c0_1, %c0_2] : memref<1x2x1x12xi8, #tpu.memory_space<vmem>>, vector<1x1x1x12xi8>
      %11 = vector.shape_cast %10 : vector<1x1x1x12xi8> to vector<1x12xi8>
      %c0_i8 = arith.constant 0 : i8
      %12 = vector.broadcast %c0_i8 : i8 to vector<1x12xi8>
      %13 = arith.cmpi ne, %11, %12 : vector<1x12xi8>
      %14 = vector.broadcast %13 : vector<1x12xi1> to vector<4x12xi1>
      %15 = arith.ori %7, %14 : vector<4x12xi1>
      %16 = arith.extui %15 : vector<4x12xi1> to vector<4x12xi32>
      %cst = arith.constant dense<2147483647> : vector<4xi32>
      %17 = vector.multi_reduction <minsi>, %16, %cst [1] : vector<4x12xi32> to vector<4xi32>
      %18 = vector.shape_cast %17 : vector<4xi32> to vector<4x1xi32>
      %c0_i32_3 = arith.constant 0 : i32
      %19 = vector.broadcast %c0_i32_3 : i32 to vector<4x1xi32>
      %20 = arith.cmpi eq, %18, %19 : vector<4x1xi32>
      %21 = vector.broadcast %20 : vector<4x1xi1> to vector<4x12xi1>
      %22 = arith.andi %15, %21 : vector<4x12xi1>
      %23 = arith.extui %22 : vector<4x12xi1> to vector<4x12xi8>
      %c0_4 = arith.constant 0 : index
      %24 = arith.index_cast %arg4 : i32 to index
      %c0_5 = arith.constant 0 : index
      %c0_6 = arith.constant 0 : index
      %25 = vector.load %arg3[%c0_4, %24, %c0_5, %c0_6] : memref<1x2x4x12xi8, #tpu.memory_space<vmem>>, vector<1x1x4x12xi8>
      %26 = vector.shape_cast %25 : vector<1x1x4x12xi8> to vector<4x12xi8>
      %27 = vector.shape_cast %23 : vector<4x12xi8> to vector<1x1x4x12xi8>
      tpu.vector_store %arg3[%c0_4, %24, %c0_5, %c0_6], %27 {strides = array<i32>} : memref<1x2x4x12xi8, #tpu.memory_space<vmem>>, vector<1x1x4x12xi8>,
    }
    %c2_i32_0 = arith.constant 2 : i32
    return
  }
  func.func @transform_0(%arg0: i32, %arg1: i32) -> (i32, i32, i32, i32) {
    %c0_i32 = arith.constant 0 : i32
    %c0_i32_0 = arith.constant 0 : i32
    %c0_i32_1 = arith.constant 0 : i32
    return %arg0, %arg1, %c0_i32, %c0_i32_0 : i32, i32, i32, i32
  }
  func.func @transform_1(%arg0: i32, %arg1: i32) -> (i32, i32, i32, i32) {
    %c0_i32 = arith.constant 0 : i32
    %c0_i32_0 = arith.constant 0 : i32
    %c0_i32_1 = arith.constant 0 : i32
    return %arg0, %arg1, %c0_i32, %c0_i32_0 : i32, i32, i32, i32
  }
}

</mosaic_0001>

<llo_original>
// kernel: tpu_custom_call.1
$region0: #{tpu_custom_call.1}
  #allocation0 [shape = 'u32[]', space=smem, size = 0x4, offset = 0x4, fixed_abs, tag = 'smem constant byte address 0x4 - core index']
  #allocation1 [shape = 'u32[72,128]{1,0:T(1,128)}', space=vmem, size = 0x9000, scoped, tag = 'internal scratch']
  %s0 = inlined_call_operand.vmem [shape: s8[2,2,1,12], index: 0, kind: input, shape index: {}]
  %s1 = inlined_call_operand.hbm [shape: s8[2,2,4,12], index: 1, kind: output, shape index: {}]
  %s2 = sld [smem:[#allocation0]]
  $region44: #{tpu_custom_call.1} parent=0
    _
  %s4 = ssub.s32 1, %s2
  %s5 = scalar_select 0, %s4, %s2
  $region1: #{tpu_custom_call.1} parent=0
    #allocation2 [shape = 'u8[2048]{0}', space=vmem, size = 0x800, scoped, tag = 'output window, operand 0']
    #allocation3 [shape = 's32[2]{0}', space=sflag, size = 0x8, scoped, tag = 'scoped memory for tpu_custom_call.1']
    %6 = vsyncpa [#allocation3], 0
    %s7 = scalar_lea.sflag [#allocation3], 1
    %8 = vsyncpa %s7, 0
    loop: start=0, step=1, limit=4
    $region2: #{tpu_custom_call.1} parent=1 // loop_pre_header
      _
    $region3: #{tpu_custom_call.1} parent=1 // loop_header
      %s10 = sphi 0, %s14
      %p11 = scmp.ge.s32.totalorder %s10, 4
      %s17 = sphi 0, %s29
      %s18 = sphi 0, %s25
      %s19 = sphi 0, %s17
      %s20 = sphi 0, %s18
      %s21 = sphi 0, %s19
      %s22 = sphi 0, %s20
      %s34 = sphi 0, %s36
      %s37 = sphi 0, %s34
      %s38 = sphi 0, %s37
      %s54 = sphi 0, %s38
      %s62 = sphi 0, %s64
      %s65 = sphi 0, %s62
      %s66 = sphi 0, %s65
      %s82 = sphi 0, %s66
    $region4: #{tpu_custom_call.1} parent=1 // loop_header_branch
      %13 = sbr.rel (%p11) target = $region8
    $region5: #{tpu_custom_call.1} parent=1 // loop_body
      %s15 = ssub.s32 %s10, 1
      %s16 = ssub.s32 %s10, 2
      %s23 = sadd.s32 1, %s18
      %p24 = scmp.ge.s32.totalorder %s23, 1
      %s25 = scalar_select %p24, 0, %s23
      %s26 = sadd.s32 1, %s17
      %s27 = scalar_select %p24, %s26, %s17
      %p28 = scmp.ge.s32.totalorder %s27, 2
      %s29 = scalar_select %p28, 0, %s27
      %s30 = ssub.s32 %s17, %s29
      %s31 = ssub.s32 %s18, %s25
      %s32 = sor.u32 %s30, %s31
      %p33 = scmp.eq.s32.totalorder %s32, 0
      %s35 = sadd.s32 %s34, 1
      %s36 = scalar_select %p33, %s34, %s35
      %p39 = pneg %p33
      %p40 = scmp.eq.s32.totalorder %s10, 1
      %p41 = por %p39, %p40
      %p42 = scmp.ne.s32.totalorder %s34, %s37
      %p43 = scmp.eq.s32.totalorder %s10, 0
      %p44 = por %p42, %p43
      %p45 = scmp.ne.s32.totalorder %s34, %s37
      %p46 = scmp.eq.s32.totalorder %s15, 1
      %p47 = por %p45, %p46
      %p48 = scmp.ne.s32.totalorder %s37, %s38
      %p49 = scmp.eq.s32.totalorder %s15, 0
      %p50 = por %p48, %p49
      %p51 = scmp.ne.s32.totalorder %s37, %s38
      %p52 = scmp.eq.s32.totalorder %s16, 1
      %p53 = por %p51, %p52
      %p55 = scmp.ne.s32.totalorder %s38, %s54
      %p56 = scmp.eq.s32.totalorder %s16, 0
      %p57 = por %p55, %p56
      %s58 = ssub.s32 %s17, %s29
      %s59 = ssub.s32 %s18, %s25
      %s60 = sor.u32 %s58, %s59
      %p61 = scmp.eq.s32.totalorder %s60, 0
      %s63 = sadd.s32 %s62, 1
      %s64 = scalar_select %p61, %s62, %s63
      %p67 = pneg %p61
      %p68 = scmp.eq.s32.totalorder %s10, 1
      %p69 = por %p67, %p68
      %p70 = scmp.ne.s32.totalorder %s62, %s65
      %p71 = scmp.eq.s32.totalorder %s10, 0
      %p72 = por %p70, %p71
      %p73 = scmp.ne.s32.totalorder %s62, %s65
      %p74 = scmp.eq.s32.totalorder %s15, 1
      %p75 = por %p73, %p74
      %p76 = scmp.ne.s32.totalorder %s65, %s66
      %p77 = scmp.eq.s32.totalorder %s15, 0
      %p78 = por %p76, %p77
      %p79 = scmp.ne.s32.totalorder %s65, %s66
      %p80 = scmp.eq.s32.totalorder %s16, 1
      %p81 = por %p79, %p80
      %p83 = scmp.ne.s32.totalorder %s66, %s82
      %p84 = scmp.eq.s32.totalorder %s16, 0
      %p85 = por %p83, %p84
      %p86 = scmp.le.s32.totalorder 1, %s10
      %p87 = scmp.lt.s32.totalorder %s10, 3
      %p88 = pnand %p86, %p87
      %p89 = pneg %p88
      // Predicated region
      $region9: #{tpu_custom_call.1} parent=5 // pred_check
        _
      $region10: #{tpu_custom_call.1} parent=5 // pred_check_branch
        %91 = sbr.rel (%p88) target = $region12
      $region11: #{tpu_custom_call.1} parent=5 // pred_region
        %s92 = ssub.s32 %s10, 1
      $region12: #{tpu_custom_call.1} parent=5 // pred_fallthru
        _
      %p93 = scmp.lt.s32.totalorder %s10, 2
      // Predicated region
      $region13: #{tpu_custom_call.1} parent=5 // pred_check
        %p94 = pneg %p93
      $region14: #{tpu_custom_call.1} parent=5 // pred_check_branch
        %96 = sbr.rel (%p94) target = $region16
      $region15: #{tpu_custom_call.1} parent=5 // pred_region
        // Predicated region
        $region17: #{tpu_custom_call.1} parent=15 // pred_check
          %p97 = pneg %p44
        $region18: #{tpu_custom_call.1} parent=15 // pred_check_branch
          %99 = sbr.rel (%p97) target = $region20
        $region19: #{tpu_custom_call.1} parent=15 // pred_region
          %s100 = smul.u32 2, %s18
          %p101 = scmp.lt.s32.totalorder %s17, 1
          %s102 = scalar_select %p101, %s17, 1
          %p103 = scmp.lt.s32.totalorder %s100, 1
          %s104 = scalar_select %p103, %s100, 1
          %s105 = smul.addr %s102, 2
          %s106 = sadd.s32 %s104, %s105
          %s107 = scalar_lea.vmem %s0, %s106
          %s108 = smul.u32 2, %s18
        $region20: #{tpu_custom_call.1} parent=15 // pred_fallthru
          _
      $region16: #{tpu_custom_call.1} parent=5 // pred_fallthru
        _
      %p109 = scmp.le.s32.totalorder 1, %s10
      %p110 = scmp.lt.s32.totalorder %s10, 3
      %p111 = pnand %p109, %p110
      %p112 = pneg %p111
      // Predicated region
      $region21: #{tpu_custom_call.1} parent=5 // pred_check
        _
      $region22: #{tpu_custom_call.1} parent=5 // pred_check_branch
        %114 = sbr.rel (%p111) target = $region24
      $region23: #{tpu_custom_call.1} parent=5 // pred_region
        %s115 = ssub.s32 %s10, 1
        %s116 = smul.u32 2, %s20
        %p117 = scmp.lt.s32.totalorder %s19, 1
        %s118 = scalar_select %p117, %s19, 1
        %p119 = scmp.lt.s32.totalorder %s116, 1
        %s120 = scalar_select %p119, %s116, 1
        %s121 = smul.addr %s118, 2
        %s122 = sadd.s32 %s120, %s121
        %s123 = scalar_lea.vmem %s0, %s122
        %p124 = pneg %p50
        %p125 = pneg %p47
        %p126 = pneg %p78
        %p127 = pneg %p75
        %s128 = sand.u32 %s65, 1
        %s129 = scalar_lea.sflag [#allocation3], %s128
        %s130 = sand.u32 %s65, 1
        %s131 = smul.addr %s130, 2
        %s132 = scalar_lea.vmem [#allocation2], %s131
        %s133 = smul.u32 2, %s20
        %p134 = scmp.lt.s32.totalorder %s19, 1
        %s135 = scalar_select %p134, %s19, 1
        %p136 = scmp.lt.s32.totalorder %s133, 1
        %s137 = scalar_select %p136, %s133, 1
        %s138 = smul.addr %s135, 2
        %s139 = sadd.s32 %s137, %s138
        %s140 = scalar_lea.vmem %s0, %s139
        %s141 = smul.u32 2, %s20
        %s142 = smul.u32 2, %s20
        %v145 = vlaneseq
        %v146 = vand.u32 %v145, 127
        %v147 = vlaneseq
        %v148 = vshrl.u32 %v147, 7
        %v149 = vsub.s32 %v146, 4
        %v150 = vsub.s32 %v149, %v148
        %vm151 = vcmp.lt.s32.totalorder %v150, 0
        %v152 = vsub.s32 0, %v150
        %v153 = vsel %vm151, %v152, %v150
        %vm154 = vcmp.gt.s32.totalorder %v153, 3
        loop: start=0, step=1, limit=2
        $region25: #{tpu_custom_call.1} parent=23 // loop_pre_header
          _
        $region26: #{tpu_custom_call.1} parent=23 // loop_header
          %s156 = sphi 0, %s160
          %p157 = scmp.ge.s32.totalorder %s156, 2
        $region27: #{tpu_custom_call.1} parent=23 // loop_header_branch
          %159 = sbr.rel (%p157) target = $region31
        $region28: #{tpu_custom_call.1} parent=23 // loop_body
          %s161 = scalar_lea.vmem %s140, %s156
          %v162 = vld [vmem:[%s161] sm:$0x1]
          %vm163 = vnez %v162
          %v164 = vsel %vm163, 16843009, 0
          %v165 = vunpack.c.0.s8 %v164
          %vm166 = vcmp.ne.s32.totalorder %v165, 0
          %v167 = vsel %vm166, 1, 0
          %v168 = vperm.slane %v167, 0
          %vm169 = vcmp.eq.s32.totalorder %v168, 1
          %vm170 = vmor %vm154, %vm169
          %v171 = vsel %vm170, 1, 0
          %vm172 = vcmask 93184
          %v173 = vsel %vm172, %v171, 2147483647
          %v174 = vand.u32 %v173, 65535
          %v175 = vshra.s32 %v173, 16
          %v176 = vcvt.s32.f32 %v174
          %v177 = vcvt.s32.f32 %v175
          %178 = vmin.xlane.f32.xlu0 %v177
          %v179 = vpop.xlane.xlu0 %178
          %vm180 = vcmp.eq.f32.partialorder %v177, %v179
          %v181 = vsel %vm180, %v176, inf
          %182 = vmin.xlane.f32.xlu0 %v181
          %v183 = vpop.xlane.xlu0 %182
          %v184 = vcvt.f32.s32 %v183
          %v185 = vcvt.f32.s32 %v179
          %v186 = vshll.u32 %v185, 16
          %v187 = vadd.s32 %v186, %v184
          %vm188 = vcmp.eq.s32.totalorder %v187, 0
          %v189 = vsel %vm188, 1, 0
          %vm190 = vcmp.eq.s32.totalorder %v189, 1
          %vm191 = vmand %vm170, %vm190
          %vm192 = vmpackc.low %vm191, %vm191
          %v193 = vsel %vm192, 16711935, 0
          %v194 = vsel %vm192, 16711935, 0
          %v195 = vpack.c.b8 %v194, %v193
          %vm196 = vnez %v195
          %v197 = vsel %vm196, 16843009, 0
          %s198 = scalar_lea.vmem %s132, %s156 [#allocation2]
          %vm199 = vcmask 90112
          %200 = vst.msk [vmem:[%s198] sm:$0x1] %vm199, %v197
        $region29: #{tpu_custom_call.1} parent=23 // loop_footer
          %s160 = sadd.s32 1, %s156
        $region30: #{tpu_custom_call.1} parent=23 // loop_footer_branch
          %155 = sbr.rel target = $region26
        $region31: #{tpu_custom_call.1} parent=23 // loop_exit
          _
        %s201 = sand.u32 %s65, 1
        %s202 = scalar_lea.sflag [#allocation3], %s201
        %s203 = sand.u32 %s65, 1
        %s204 = smul.addr %s203, 2
        %s205 = scalar_lea.vmem [#allocation2], %s204
        // Predicated region
        $region32: #{tpu_custom_call.1} parent=23 // pred_check
          %p206 = pneg %p75
        $region33: #{tpu_custom_call.1} parent=23 // pred_check_branch
          %208 = sbr.rel (%p206) target = $region35
        $region34: #{tpu_custom_call.1} parent=23 // pred_region
          %s209 = smul.u32 2, %s20
          %211 = vsyncadd %s202, 0
          %s212 = smul.addr %s19, 2
          %s213 = sadd.s32 %s209, %s212
          %s214 = scalar_lea.hbm %s1, %s213
          %s215 = sshll.u32 %s205, 4
          %s216 = int_to_ptr.vmem [resolvable:$true] %s215
          %s217 = sshll.u32 %s214, 4
          %s218 = int_to_ptr.hbm [resolvable:$true] %s217
          %223 = dma.vmem_to_hbm [thread:$0]  %s216, 32, %s218, %s202, 16, 16, 1
        $region35: #{tpu_custom_call.1} parent=23 // pred_fallthru
          _
      $region24: #{tpu_custom_call.1} parent=5 // pred_fallthru
        _
      %p224 = scmp.le.s32.totalorder 2, %s10
      // Predicated region
      $region36: #{tpu_custom_call.1} parent=5 // pred_check
        %p225 = pneg %p224
      $region37: #{tpu_custom_call.1} parent=5 // pred_check_branch
        %227 = sbr.rel (%p225) target = $region39
      $region38: #{tpu_custom_call.1} parent=5 // pred_region
        %s228 = ssub.s32 %s10, 2
        // Predicated region
        $region40: #{tpu_custom_call.1} parent=38 // pred_check
          %p229 = pneg %p81
        $region41: #{tpu_custom_call.1} parent=38 // pred_check_branch
          %231 = sbr.rel (%p229) target = $region43
        $region42: #{tpu_custom_call.1} parent=38 // pred_region
          %s232 = sand.u32 %s66, 1
          %s233 = scalar_lea.sflag [#allocation3], %s232
          %s234 = sand.u32 %s66, 1
          %s235 = smul.addr %s234, 2
          %s236 = scalar_lea.vmem [#allocation2], %s235
          %238 = dma.done %s233, 32
        $region43: #{tpu_custom_call.1} parent=38 // pred_fallthru
          _
      $region39: #{tpu_custom_call.1} parent=5 // pred_fallthru
        _
    $region6: #{tpu_custom_call.1} parent=1 // loop_footer
      %s14 = sadd.s32 1, %s10
    $region7: #{tpu_custom_call.1} parent=1 // loop_footer_branch
      %9 = sbr.rel target = $region3
    $region8: #{tpu_custom_call.1} parent=1 // loop_exit
      _
    %239 = vsyncpa [#allocation3], 1
    %s240 = scalar_lea.sflag [#allocation3], 1
    %241 = vsyncpa %s240, 1

</llo_original>
